<compile_context>
chip_gen: v6e
topology: v6e:2x2x1
jax: 0.10.0
libtpu: 0.0.40
codegen_flags: <defaults>
</compile_context>

<pallas_src>
from functools import partial

import jax
import jax.numpy as jnp
from jax.experimental import pallas as pl
from jax.experimental.pallas import tpu as pltpu


def _gem_kernel(p_ref, x_ref, pool_ref, o_ref, *, eps, lk, inv_k, compute_dtype):
    """One (rows, L) input block -> one (rows, L_out) output block.

    p_ref    : SMEM (1,)       float32  GeM exponent p
    x_ref    : VMEM (rows, L)           input block (rows = flattened N*C)
    pool_ref : VMEM (L, L_out)          block-diagonal 0/1 membership matrix
    o_ref    : VMEM (rows, L_out)       output block
    """
    p = p_ref[0]                                     # f32 scalar
    x = x_ref[...]                                   # (rows, L)
    rows, l_full = x.shape

    xc = jnp.maximum(x.astype(compute_dtype), jnp.asarray(eps, compute_dtype))

    if lk != l_full:
        # Dropped tail columns have zero weight in the pooling matrix, but
        # inf * 0 would still poison the matmul; force the tail to 1.0.
        lane = jax.lax.broadcasted_iota(jnp.int32, (rows, l_full), 1)
        xc = jnp.where(lane < lk, xc, jnp.asarray(1.0, compute_dtype))

    # x ** p with a traced scalar exponent (x > 0 after the clamp).  EUP work.
    pc = p.astype(compute_dtype)
    xp = jnp.exp(pc * jnp.log(xc))                   # (rows, L)

    # Window sum via the (idle) MXU: (rows, L) @ (L, L_out), f32 accumulation.
    prec = (jax.lax.Precision.HIGHEST if compute_dtype == jnp.float32
            else jax.lax.Precision.DEFAULT)
    m = jax.lax.dot_general(
        xp, pool_ref[...],
        dimension_numbers=(((1,), (0,)), ((), ())),
        precision=prec,
        preferred_element_type=jnp.float32)          # (rows, L_out) f32 sums
    m = m * jnp.float32(inv_k)                       # window mean (exact 0/1 weights)

    inv_p = 1.0 / p                                  # hoisted scalar reciprocal
    y = jnp.exp(jnp.log(m) * inv_p)                  # m ** (1/p) in f32
    o_ref[...] = y.astype(o_ref.dtype)


def _pick_row_tile(nc, l, itemsize, budget_bytes=2 * 1024 * 1024):
    """Multiple-of-8 row tile sized to ~budget_bytes of input block."""
    if nc <= 8:
        return nc                                    # full dim -> always legal
    t = max(8, min(nc, budget_bytes // max(1, l * itemsize)))
    t = (t // 8) * 8
    return int(max(8, min(t, 1024)))


def gem_forward(x_ncl, p, kernel_size, eps=1e-6):
    """GeM forward. x_ncl: (N, C, L) as in PyTorch. Returns (N, C, L // kernel_size)."""
    N, C, L = x_ncl.shape
    K = int(kernel_size)
    L_out = L // K
    if L_out == 0:
        # avg_pool1d would produce an empty output; nothing for the kernel to do.
        return jnp.zeros((N, C, 0), dtype=x_ncl.dtype)
    lk = L_out * K

    # bf16 inputs keep the transcendental-heavy part in bf16 (v6e/v7x EUP);
    # f32 inputs stay f32 throughout.
    compute_dtype = jnp.bfloat16 if x_ncl.dtype == jnp.bfloat16 else jnp.float32

    # Flatten batch x channels into rows: contiguous reshape, no data movement.
    NC = N * C
    x2 = x_ncl.reshape(NC, L)

    # Block-diagonal window-membership matrix: P[l, o] = 1 iff l // K == o.
    # Rows l >= lk never match, implementing the trailing-element drop.  The
    # 1/K scale is applied to the f32 accumulator (so weights are exact here).
    l_idx = jnp.arange(L, dtype=jnp.int32)
    o_idx = jnp.arange(L_out, dtype=jnp.int32)
    pool = ((l_idx[:, None] // K) == o_idx[None, :]).astype(compute_dtype)

    itemsize = jnp.dtype(x_ncl.dtype).itemsize
    row_tile = _pick_row_tile(NC, L, itemsize)
    n_rt = pl.cdiv(NC, row_tile)

    p_arr = jnp.reshape(jnp.asarray(p, jnp.float32), (1,))

    # VMEM budget: double-buffered in/out blocks + resident pooling matrix +
    # f32 temporaries; capped for v7x's 64 MiB physical VMEM.
    est = (2 * (row_tile * L + row_tile * L_out) * itemsize
           + L * L_out * jnp.dtype(compute_dtype).itemsize
           + 6 * row_tile * L * 4)
    vmem_limit = int(min(max(2 * est, 32 * 1024 * 1024), 64 * 1024 * 1024))

    y2 = pl.pallas_call(
        partial(_gem_kernel, eps=float(eps), lk=lk, inv_k=1.0 / K,
                compute_dtype=compute_dtype),
        out_shape=jax.ShapeDtypeStruct((NC, L_out), x_ncl.dtype),
        grid=(n_rt,),
        in_specs=[
            pl.BlockSpec(memory_space=pltpu.SMEM),               # p (scalar)
            pl.BlockSpec((row_tile, L), lambda r: (r, 0)),       # x rows block
            pl.BlockSpec((L, L_out), lambda r: (0, 0)),          # pooling matrix
        ],
        out_specs=pl.BlockSpec((row_tile, L_out), lambda r: (r, 0)),
        compiler_params=pltpu.CompilerParams(
            dimension_semantics=("parallel",),
            vmem_limit_bytes=vmem_limit,
        ),
    )(p_arr, x2, pool)

    return y2.reshape(N, C, L_out)


def gem_reference(x_ncl, p, kernel_size, eps=1e-6):
    """Pure-JAX reference mirroring F.avg_pool1d(clamp(x, eps)**p, K)**(1/p)."""
    N, C, L = x_ncl.shape
    K = int(kernel_size)
    L_out = L // K
    x = jnp.maximum(x_ncl[:, :, : L_out * K].astype(jnp.float32), eps) ** p
    x = x.reshape(N, C, L_out, K).mean(axis=-1)
    return (x ** (1.0 / p)).astype(x_ncl.dtype)


if __name__ == "__main__":
    key = jax.random.PRNGKey(0)
    kernel_size = 4
    eps = 1e-6
    # Deterministic parameter init (matches nn.Parameter(torch.ones(1) * 3)).
    p = jnp.ones((1,), dtype=jnp.float32) * 3.0

    # Case 1: main path (L divisible by the window).
    N, C, L = 2, 4, 16
    x = jax.random.normal(key, (N, C, L), dtype=jnp.float32)
    y = jax.block_until_ready(gem_forward(x, p, kernel_size, eps))
    y_ref = gem_reference(x, p, kernel_size, eps)
    assert y.shape == (N, C, L // kernel_size), y.shape
    assert jnp.allclose(y, y_ref, atol=2e-3, rtol=2e-3), (y, y_ref)

    # Case 2: trailing elements dropped (L % kernel_size != 0).
    x2 = jax.random.normal(jax.random.PRNGKey(1), (2, 4, 18), dtype=jnp.float32)
    y2 = jax.block_until_ready(gem_forward(x2, p, kernel_size, eps))
    y2_ref = gem_reference(x2, p, kernel_size, eps)
    assert y2.shape == (2, 4, 18 // kernel_size), y2.shape
    assert jnp.allclose(y2, y2_ref, atol=2e-3, rtol=2e-3), (y2, y2_ref)

    # Case 3: bf16 compute path (shape / finiteness smoke check).
    xb = jax.random.normal(jax.random.PRNGKey(2), (2, 4, 16), dtype=jnp.bfloat16)
    yb = jax.block_until_ready(gem_forward(xb, p, kernel_size, eps))
    assert yb.shape == (2, 4, 4), yb.shape
    assert bool(jnp.all(jnp.isfinite(yb.astype(jnp.float32))))

    print("KERNEL_OK")
</pallas_src>

<mosaic_0001>
module attributes {stable_mosaic.version = 11 : i64} {
  func.func @_gem_kernel(%arg0: i32, %arg1: memref<1xf32, #tpu.memory_space<smem>>, %arg2: memref<8x16xf32, #tpu.memory_space<vmem>>, %arg3: memref<16x4xf32, #tpu.memory_space<vmem>>, %arg4: memref<8x4xf32, #tpu.memory_space<vmem>>) attributes {dimension_semantics = [#tpu.dimension_semantics<parallel>], iteration_bounds = array<i64: 1>, scalar_prefetch = 0 : i64, scratch_operands = 0 : i64, tpu.core_type = #tpu.core_type<tc>, window_params = [{transform_indices = @transform_0, window_bounds = array<i64: 1>}, {transform_indices = @transform_1, window_bounds = array<i64: 8, 16>}, {pipeline_mode = #tpu.pipeline_mode<synchronous>, transform_indices = @transform_2, window_bounds = array<i64: 16, 4>}, {transform_indices = @transform_3, window_bounds = array<i64: 8, 4>}]} {
    %c0 = arith.constant 0 : index
    %0 = memref.load %arg1[%c0] : memref<1xf32, #tpu.memory_space<smem>>
    %c0_0 = arith.constant 0 : index
    %c0_1 = arith.constant 0 : index
    %1 = vector.load %arg2[%c0_0, %c0_1] : memref<8x16xf32, #tpu.memory_space<vmem>>, vector<8x16xf32>
    %cst = arith.constant 9.99999997E-7 : f32
    %2 = vector.broadcast %cst : f32 to vector<8x16xf32>
    %3 = arith.maximumf %1, %2 : vector<8x16xf32>
    %4 = math.log %3 : vector<8x16xf32>
    %5 = vector.broadcast %0 : f32 to vector<8x16xf32>
    %6 = arith.mulf %5, %4 : vector<8x16xf32>
    %7 = math.exp %6 : vector<8x16xf32>
    %c0_2 = arith.constant 0 : index
    %c0_3 = arith.constant 0 : index
    %8 = vector.load %arg3[%c0_2, %c0_3] : memref<16x4xf32, #tpu.memory_space<vmem>>, vector<16x4xf32>
    %cst_4 = arith.constant dense<0.000000e+00> : vector<8x4xf32>
    %9 = tpu.matmul %7, %8, %cst_4 {dimension_numbers = #tpu.dot_dimension_numbers<[1], [0], [0], [1], [0, 0, 1, 1], [], []>, precision = #tpu.contract_precision<fp32>} : vector<8x16xf32>, vector<16x4xf32>, vector<8x4xf32> -> vector<8x4xf32>
    %cst_5 = arith.constant 2.500000e-01 : f32
    %10 = vector.broadcast %cst_5 : f32 to vector<8x4xf32>
    %11 = arith.mulf %9, %10 : vector<8x4xf32>
    %cst_6 = arith.constant 1.000000e+00 : f32
    %12 = arith.divf %cst_6, %0 : f32
    %13 = math.log %11 : vector<8x4xf32>
    %14 = vector.broadcast %12 : f32 to vector<8x4xf32>
    %15 = arith.mulf %13, %14 : vector<8x4xf32>
    %16 = math.exp %15 : vector<8x4xf32>
    %c0_7 = arith.constant 0 : index
    %c0_8 = arith.constant 0 : index
    %17 = vector.load %arg4[%c0_7, %c0_8] : memref<8x4xf32, #tpu.memory_space<vmem>>, vector<8x4xf32>
    tpu.vector_store %arg4[%c0_7, %c0_8], %16 {strides = array<i32>} : memref<8x4xf32, #tpu.memory_space<vmem>>, vector<8x4xf32>,
    return
  }
  func.func @transform_0(%arg0: i32) -> i32 {
    %c0_i32 = arith.constant 0 : i32
    %c0_i32_0 = arith.constant 0 : i32
    return %c0_i32 : i32
  }
  func.func @transform_1(%arg0: i32) -> (i32, i32) {
    %c0_i32 = arith.constant 0 : i32
    %c0_i32_0 = arith.constant 0 : i32
    return %arg0, %c0_i32 : i32, i32
  }
  func.func @transform_2(%arg0: i32) -> (i32, i32) {
    %c0_i32 = arith.constant 0 : i32
    %c0_i32_0 = arith.constant 0 : i32
    %c0_i32_1 = arith.constant 0 : i32
    return %c0_i32, %c0_i32_0 : i32, i32
  }
  func.func @transform_3(%arg0: i32) -> (i32, i32) {
    %c0_i32 = arith.constant 0 : i32
    %c0_i32_0 = arith.constant 0 : i32
    return %arg0, %c0_i32 : i32, i32
  }
}

</mosaic_0001>

<llo_original>
// kernel: tpu_custom_call.1
$region0: #{tpu_custom_call.1}
  #allocation0 [shape = 'u32[]', space=smem, size = 0x4, offset = 0x4, fixed_abs, tag = 'smem constant byte address 0x4 - core index']
  #allocation1 [shape = 'u32[144,128]{1,0:T(1,128)}', space=vmem, size = 0x12000, scoped, tag = 'internal scratch']
  #allocation2 [shape = 'f32[1]{0:T(128)S(6)}', space=smem, size = 0x200, scoped, tag = 'scoped memory for tpu_custom_call.1']
  %s0 = inlined_call_operand.<no memory space> [shape: f32[1], index: 0, kind: input, shape index: {}]
  %s1 = inlined_call_operand.vmem [shape: f32[8,16], index: 1, kind: input, shape index: {}]
  %s2 = inlined_call_operand.vmem [shape: f32[16,4], index: 2, kind: input, shape index: {}]
  %s3 = inlined_call_operand.vmem [shape: f32[8,4], index: 3, kind: output, shape index: {}]
  %s4 = sld [smem:[#allocation0]]
  $region22: #{tpu_custom_call.1} parent=0
    _
  %s6 = ssub.s32 1, %s4
  %s7 = scalar_select 0, %s6, %s4
  %8 = sst [smem:[#allocation2]] %s0
  // Predicated region
  $region2: #{tpu_custom_call.1} parent=0 // pred_check
    _
  $region3: #{tpu_custom_call.1} parent=0 // pred_check_branch
    %10 = sbr.rel (0) target = $region5
  $region4: #{tpu_custom_call.1} parent=0 // pred_region
    _
  $region5: #{tpu_custom_call.1} parent=0 // pred_fallthru
    _
  // Predicated region
  $region6: #{tpu_custom_call.1} parent=0 // pred_check
    _
  $region7: #{tpu_custom_call.1} parent=0 // pred_check_branch
    %12 = sbr.rel (0) target = $region9
  $region8: #{tpu_custom_call.1} parent=0 // pred_region
    _
  $region9: #{tpu_custom_call.1} parent=0 // pred_fallthru
    _
  // Predicated region
  $region10: #{tpu_custom_call.1} parent=0 // pred_check
    _
  $region11: #{tpu_custom_call.1} parent=0 // pred_check_branch
    %14 = sbr.rel (0) target = $region13
  $region12: #{tpu_custom_call.1} parent=0 // pred_region
    _
  $region13: #{tpu_custom_call.1} parent=0 // pred_fallthru
    _
  %s15 = sld [smem:[#allocation2]]
  %v16 = vld [vmem:[%s1] sm:$0xff]
  %v17 = vmax.f32 %v16, 1e-06
  %v18 = vlog2.pop %v17
  %v19 = vmul.f32 %v18, 0.6931472
  %v20 = vstv %s15
  %v21 = vmul.f32 %v20, %v19
  %v22 = vmul.f32 %v21, 1.442695
  %v23 = vpow.pop %v22
  %v24 = vld [vmem:[%s2] sm:$0xff]
  %v25 = vld [vmem:[%s2 + $0x8] sm:$0xff]
  %vm26 = vcmask 130048
  %v28 = vsel %vm26, %v23, 0
  %30 = vmatprep.subr.mxu0 0.0
  %31 = vmatpush1.msra.mxu0 0.0
  %32 = vmatprep.subr.mxu0 0.0
  %33 = vmatpush1.msra.mxu0 0.0
  %34 = vmatprep.subr.mxu0 0.0
  %35 = vmatpush1.msra.mxu0 0.0
  %36 = vmatprep.subr.mxu0 0.0
  %37 = vmatpush1.msra.mxu0 0.0
  %38 = vmatprep.subr.mxu0 0.0
  %39 = vmatpush1.msra.mxu0 0.0
  %40 = vmatprep.subr.mxu0 0.0
  %41 = vmatpush1.msra.mxu0 0.0
  %42 = vmatprep.subr.mxu0 0.0
  %43 = vmatpush1.msra.mxu0 0.0
  %44 = vmatprep.subr.mxu0 0.0
  %45 = vmatpush1.msra.mxu0 0.0
  %46 = vmatprep.subr.mxu0 0.0
  %47 = vmatpush1.msra.mxu0 0.0
  %48 = vmatprep.subr.mxu0 0.0
  %49 = vmatpush1.msra.mxu0 0.0
  %50 = vmatprep.subr.mxu0 0.0
  %51 = vmatpush1.msra.mxu0 0.0
  %52 = vmatprep.subr.mxu0 0.0
  %53 = vmatpush1.msra.mxu0 0.0
  %54 = vmatprep.subr.mxu0 0.0
  %55 = vmatpush1.msra.mxu0 0.0
  %56 = vmatprep.subr.mxu0 0.0
  %57 = vmatpush1.msra.mxu0 0.0
  %58 = vmatprep.subr.mxu0 0.0
  %v59 = vand.u32 %v25, 4294901760
  %60 = vmatpush1.msra.mxu0 %v59
  %61 = vmatprep.subr.mxu0 0.0
  %v62 = vand.u32 %v24, 4294901760
  %63 = vmatpush1.msra.mxu0 %v62
  %64 = vmatprep.subr.mxu0 0.0
  %65 = vmatpush2.msra.mxu0 0.0
  %66 = vmatprep.subr.mxu0 0.0
  %67 = vmatpush2.msra.mxu0 0.0
  %68 = vmatprep.subr.mxu0 0.0
  %69 = vmatpush2.msra.mxu0 0.0
  %70 = vmatprep.subr.mxu0 0.0
  %71 = vmatpush2.msra.mxu0 0.0
  %72 = vmatprep.subr.mxu0 0.0
  %73 = vmatpush2.msra.mxu0 0.0
  %74 = vmatprep.subr.mxu0 0.0
  %75 = vmatpush2.msra.mxu0 0.0
  %76 = vmatprep.subr.mxu0 0.0
  %77 = vmatpush2.msra.mxu0 0.0
  %78 = vmatprep.subr.mxu0 0.0
  %79 = vmatpush2.msra.mxu0 0.0
  %80 = vmatprep.subr.mxu0 0.0
  %81 = vmatpush2.msra.mxu0 0.0
  %82 = vmatprep.subr.mxu0 0.0
  %83 = vmatpush2.msra.mxu0 0.0
  %84 = vmatprep.subr.mxu0 0.0
  %85 = vmatpush2.msra.mxu0 0.0
  %86 = vmatprep.subr.mxu0 0.0
  %87 = vmatpush2.msra.mxu0 0.0
  %88 = vmatprep.subr.mxu0 0.0
  %89 = vmatpush2.msra.mxu0 0.0
  %90 = vmatprep.subr.mxu0 0.0
  %91 = vmatpush2.msra.mxu0 0.0
  %92 = vmatprep.subr.mxu0 0.0
  %93 = vmatpush2.msra.mxu0 0.0
  %94 = vmatprep.subr.mxu0 0.0
  %95 = vmatpush2.msra.mxu0 0.0
  %96 = vmatprep.mubr.f32.mxu0 0.0
  %v97 = vand.u32 %v28, 4294901760
  %v98 = vsub.f32 %v28, %v97
  %v99 = vand.u32 %v98, 4294901760
  %v100 = vsub.f32 %v98, %v99
  %v101 = vand.u32 %v100, 4294901760
  %102 = vmatmul.mubr.f32.gmra.mxu0 %v101
  %v103 = vpop.f32.mrf.mxu0
  %v104 = vadd.f32 0.0, %v103
  %v105 = vpop.f32.mrf.mxu0
  %106 = vdwg.mxu0
  %107 = vmatprep.subr.mxu0 0.0
  %108 = vmatpush1.msra.mxu0 0.0
  %109 = vmatprep.subr.mxu0 0.0
  %110 = vmatpush1.msra.mxu0 0.0
  %111 = vmatprep.subr.mxu0 0.0
  %112 = vmatpush1.msra.mxu0 0.0
  %113 = vmatprep.subr.mxu0 0.0
  %114 = vmatpush1.msra.mxu0 0.0
  %115 = vmatprep.subr.mxu0 0.0
  %116 = vmatpush1.msra.mxu0 0.0
  %117 = vmatprep.subr.mxu0 0.0
  %118 = vmatpush1.msra.mxu0 0.0
  %119 = vmatprep.subr.mxu0 0.0
  %120 = vmatpush1.msra.mxu0 0.0
  %121 = vmatprep.subr.mxu0 0.0
  %122 = vmatpush1.msra.mxu0 0.0
  %123 = vmatprep.subr.mxu0 0.0
  %124 = vmatpush1.msra.mxu0 0.0
  %125 = vmatprep.subr.mxu0 0.0
  %126 = vmatpush1.msra.mxu0 0.0
  %127 = vmatprep.subr.mxu0 0.0
  %128 = vmatpush1.msra.mxu0 0.0
  %129 = vmatprep.subr.mxu0 0.0
  %130 = vmatpush1.msra.mxu0 0.0
  %131 = vmatprep.subr.mxu0 0.0
  %132 = vmatpush1.msra.mxu0 0.0
  %133 = vmatprep.subr.mxu0 0.0
  %134 = vmatpush1.msra.mxu0 0.0
  %135 = vmatprep.subr.mxu0 0.0
  %v136 = vand.u32 %v25, 4294901760
  %v137 = vsub.f32 %v25, %v136
  %v138 = vand.u32 %v137, 4294901760
  %v139 = vsub.f32 %v137, %v138
  %v140 = vand.u32 %v139, 4294901760
  %141 = vmatpush1.msra.mxu0 %v140
  %142 = vmatprep.subr.mxu0 0.0
  %v143 = vand.u32 %v24, 4294901760
  %v144 = vsub.f32 %v24, %v143
  %v145 = vand.u32 %v144, 4294901760
  %v146 = vsub.f32 %v144, %v145
  %v147 = vand.u32 %v146, 4294901760
  %148 = vmatpush1.msra.mxu0 %v147
  %149 = vmatprep.subr.mxu0 0.0
  %150 = vmatpush2.msra.mxu0 0.0
  %151 = vmatprep.subr.mxu0 0.0
  %152 = vmatpush2.msra.mxu0 0.0
  %153 = vmatprep.subr.mxu0 0.0
  %154 = vmatpush2.msra.mxu0 0.0
  %155 = vmatprep.subr.mxu0 0.0
  %156 = vmatpush2.msra.mxu0 0.0
  %157 = vmatprep.subr.mxu0 0.0
  %158 = vmatpush2.msra.mxu0 0.0
  %159 = vmatprep.subr.mxu0 0.0
  %160 = vmatpush2.msra.mxu0 0.0
  %161 = vmatprep.subr.mxu0 0.0
  %162 = vmatpush2.msra.mxu0 0.0
  %163 = vmatprep.subr.mxu0 0.0
  %164 = vmatpush2.msra.mxu0 0.0
  %165 = vmatprep.subr.mxu0 0.0
  %166 = vmatpush2.msra.mxu0 0.0
  %167 = vmatprep.subr.mxu0 0.0
  %168 = vmatpush2.msra.mxu0 0.0
  %169 = vmatprep.subr.mxu0 0.0
  %170 = vmatpush2.msra.mxu0 0.0
  %171 = vmatprep.subr.mxu0 0.0
  %172 = vmatpush2.msra.mxu0 0.0
  %173 = vmatprep.subr.mxu0 0.0
  %174 = vmatpush2.msra.mxu0 0.0
  %175 = vmatprep.subr.mxu0 0.0
  %176 = vmatpush2.msra.mxu0 0.0
  %177 = vmatprep.subr.mxu0 0.0
  %178 = vmatpush2.msra.mxu0 0.0
  %179 = vmatprep.subr.mxu0 0.0
  %180 = vmatpush2.msra.mxu0 0.0
  %181 = vmatprep.mubr.f32.mxu0 0.0
  %v182 = vand.u32 %v28, 4294901760
  %183 = vmatmul.mubr.f32.gmra.mxu0 %v182
  %v184 = vpop.f32.mrf.mxu0
  %v185 = vadd.f32 %v104, %v184
  %v186 = vpop.f32.mrf.mxu0
  %187 = vdwg.mxu0
  %188 = vmatprep.subr.mxu0 0.0
  %189 = vmatpush1.msra.mxu0 0.0
  %190 = vmatprep.subr.mxu0 0.0
  %191 = vmatpush1.msra.mxu0 0.0
  %192 = vmatprep.subr.mxu0 0.0
  %193 = vmatpush1.msra.mxu0 0.0
  %194 = vmatprep.subr.mxu0 0.0
  %195 = vmatpush1.msra.mxu0 0.0
  %196 = vmatprep.subr.mxu0 0.0
  %197 = vmatpush1.msra.mxu0 0.0
  %198 = vmatprep.subr.mxu0 0.0
  %199 = vmatpush1.msra.mxu0 0.0
  %200 = vmatprep.subr.mxu0 0.0
  %201 = vmatpush1.msra.mxu0 0.0
  %202 = vmatprep.subr.mxu0 0.0
  %203 = vmatpush1.msra.mxu0 0.0
  %204 = vmatprep.subr.mxu0 0.0
  %205 = vmatpush1.msra.mxu0 0.0
  %206 = vmatprep.subr.mxu0 0.0
  %207 = vmatpush1.msra.mxu0 0.0
  %208 = vmatprep.subr.mxu0 0.0
  %209 = vmatpush1.msra.mxu0 0.0
  %210 = vmatprep.subr.mxu0 0.0
  %211 = vmatpush1.msra.mxu0 0.0
  %212 = vmatprep.subr.mxu0 0.0
  %213 = vmatpush1.msra.mxu0 0.0
  %214 = vmatprep.subr.mxu0 0.0
  %215 = vmatpush1.msra.mxu0 0.0
  %216 = vmatprep.subr.mxu0 0.0
  %v217 = vand.u32 %v25, 4294901760
  %v218 = vsub.f32 %v25, %v217
  %219 = vmatpush1.msra.mxu0 %v218
  %220 = vmatprep.subr.mxu0 0.0
  %v221 = vand.u32 %v24, 4294901760
  %v222 = vsub.f32 %v24, %v221
  %223 = vmatpush1.msra.mxu0 %v222
  %224 = vmatprep.subr.mxu0 0.0
  %225 = vmatpush2.msra.mxu0 0.0
  %226 = vmatprep.subr.mxu0 0.0
  %227 = vmatpush2.msra.mxu0 0.0
  %228 = vmatprep.subr.mxu0 0.0
  %229 = vmatpush2.msra.mxu0 0.0
  %230 = vmatprep.subr.mxu0 0.0
  %231 = vmatpush2.msra.mxu0 0.0
  %232 = vmatprep.subr.mxu0 0.0
  %233 = vmatpush2.msra.mxu0 0.0
  %234 = vmatprep.subr.mxu0 0.0
  %235 = vmatpush2.msra.mxu0 0.0
  %236 = vmatprep.subr.mxu0 0.0
  %237 = vmatpush2.msra.mxu0 0.0
  %238 = vmatprep.subr.mxu0 0.0
  %239 = vmatpush2.msra.mxu0 0.0
  %240 = vmatprep.subr.mxu0 0.0
  %241 = vmatpush2.msra.mxu0 0.0
  %242 = vmatprep.subr.mxu0 0.0
  %243 = vmatpush2.msra.mxu0 0.0
  %244 = vmatprep.subr.mxu0 0.0
  %245 = vmatpush2.msra.mxu0 0.0
  %246 = vmatprep.subr.mxu0 0.0
  %247 = vmatpush2.msra.mxu0 0.0
  %248 = vmatprep.subr.mxu0 0.0
  %249 = vmatpush2.msra.mxu0 0.0
  %250 = vmatprep.subr.mxu0 0.0
  %251 = vmatpush2.msra.mxu0 0.0
  %252 = vmatprep.subr.mxu0 0.0
  %253 = vmatpush2.msra.mxu0 0.0
  %254 = vmatprep.subr.mxu0 0.0
  %255 = vmatpush2.msra.mxu0 0.0
  %256 = vmatprep.mubr.f32.mxu0 0.0
  %v257 = vand.u32 %v28, 4294901760
  %v258 = vsub.f32 %v28, %v257
  %259 = vmatmul.mubr.f32.gmra.mxu0 %v258
  %v260 = vpop.f32.mrf.mxu0
  %v261 = vadd.f32 %v185, %v260
  %v262 = vpop.f32.mrf.mxu0
  %263 = vdwg.mxu0
  %264 = vmatprep.subr.mxu0 0.0
  %265 = vmatpush1.msra.mxu0 0.0
  %266 = vmatprep.subr.mxu0 0.0
  %267 = vmatpush1.msra.mxu0 0.0
  %268 = vmatprep.subr.mxu0 0.0
  %269 = vmatpush1.msra.mxu0 0.0
  %270 = vmatprep.subr.mxu0 0.0
  %271 = vmatpush1.msra.mxu0 0.0
  %272 = vmatprep.subr.mxu0 0.0
  %273 = vmatpush1.msra.mxu0 0.0
  %274 = vmatprep.subr.mxu0 0.0
  %275 = vmatpush1.msra.mxu0 0.0
  %276 = vmatprep.subr.mxu0 0.0
  %277 = vmatpush1.msra.mxu0 0.0
  %278 = vmatprep.subr.mxu0 0.0
  %279 = vmatpush1.msra.mxu0 0.0
  %280 = vmatprep.subr.mxu0 0.0
  %281 = vmatpush1.msra.mxu0 0.0
  %282 = vmatprep.subr.mxu0 0.0
  %283 = vmatpush1.msra.mxu0 0.0
  %284 = vmatprep.subr.mxu0 0.0
  %285 = vmatpush1.msra.mxu0 0.0
  %286 = vmatprep.subr.mxu0 0.0
  %287 = vmatpush1.msra.mxu0 0.0
  %288 = vmatprep.subr.mxu0 0.0
  %289 = vmatpush1.msra.mxu0 0.0
  %290 = vmatprep.subr.mxu0 0.0
  %291 = vmatpush1.msra.mxu0 0.0
  %292 = vmatprep.subr.mxu0 0.0
  %v293 = vand.u32 %v25, 4294901760
  %294 = vmatpush1.msra.mxu0 %v293
  %295 = vmatprep.subr.mxu0 0.0
  %v296 = vand.u32 %v24, 4294901760
  %297 = vmatpush1.msra.mxu0 %v296
  %298 = vmatprep.subr.mxu0 0.0
  %299 = vmatpush2.msra.mxu0 0.0
  %300 = vmatprep.subr.mxu0 0.0
  %301 = vmatpush2.msra.mxu0 0.0
  %302 = vmatprep.subr.mxu0 0.0
  %303 = vmatpush2.msra.mxu0 0.0
  %304 = vmatprep.subr.mxu0 0.0
  %305 = vmatpush2.msra.mxu0 0.0
  %306 = vmatprep.subr.mxu0 0.0
  %307 = vmatpush2.msra.mxu0 0.0
  %308 = vmatprep.subr.mxu0 0.0
  %309 = vmatpush2.msra.mxu0 0.0
  %310 = vmatprep.subr.mxu0 0.0
  %311 = vmatpush2.msra.mxu0 0.0
  %312 = vmatprep.subr.mxu0 0.0
  %313 = vmatpush2.msra.mxu0 0.0
  %314 = vmatprep.subr.mxu0 0.0
  %315 = vmatpush2.msra.mxu0 0.0
  %316 = vmatprep.subr.mxu0 0.0
  %317 = vmatpush2.msra.mxu0 0.0
  %318 = vmatprep.subr.mxu0 0.0
  %319 = vmatpush2.msra.mxu0 0.0
  %320 = vmatprep.subr.mxu0 0.0
  %321 = vmatpush2.msra.mxu0 0.0
  %322 = vmatprep.subr.mxu0 0.0
  %323 = vmatpush2.msra.mxu0 0.0
  %324 = vmatprep.subr.mxu0 0.0
  %325 = vmatpush2.msra.mxu0 0.0
  %326 = vmatprep.subr.mxu0 0.0
  %327 = vmatpush2.msra.mxu0 0.0
  %328 = vmatprep.subr.mxu0 0.0
  %329 = vmatpush2.msra.mxu0 0.0
  %330 = vmatprep.mubr.f32.mxu0 0.0
  %v331 = vand.u32 %v28, 4294901760
  %v332 = vsub.f32 %v28, %v331
  %v333 = vand.u32 %v332, 4294901760
  %334 = vmatmul.mubr.f32.gmra.mxu0 %v333
  %v335 = vpop.f32.mrf.mxu0
  %v336 = vadd.f32 %v261, %v335
  %v337 = vpop.f32.mrf.mxu0
  %338 = vdwg.mxu0
  %339 = vmatprep.subr.mxu0 0.0
  %340 = vmatpush1.msra.mxu0 0.0
  %341 = vmatprep.subr.mxu0 0.0
  %342 = vmatpush1.msra.mxu0 0.0
  %343 = vmatprep.subr.mxu0 0.0
  %344 = vmatpush1.msra.mxu0 0.0
  %345 = vmatprep.subr.mxu0 0.0
  %346 = vmatpush1.msra.mxu0 0.0
  %347 = vmatprep.subr.mxu0 0.0
  %348 = vmatpush1.msra.mxu0 0.0
  %349 = vmatprep.subr.mxu0 0.0
  %350 = vmatpush1.msra.mxu0 0.0
  %351 = vmatprep.subr.mxu0 0.0
  %352 = vmatpush1.msra.mxu0 0.0
  %353 = vmatprep.subr.mxu0 0.0
  %354 = vmatpush1.msra.mxu0 0.0
  %355 = vmatprep.subr.mxu0 0.0
  %356 = vmatpush1.msra.mxu0 0.0
  %357 = vmatprep.subr.mxu0 0.0
  %358 = vmatpush1.msra.mxu0 0.0
  %359 = vmatprep.subr.mxu0 0.0
  %360 = vmatpush1.msra.mxu0 0.0
  %361 = vmatprep.subr.mxu0 0.0
  %362 = vmatpush1.msra.mxu0 0.0
  %363 = vmatprep.subr.mxu0 0.0
  %364 = vmatpush1.msra.mxu0 0.0
  %365 = vmatprep.subr.mxu0 0.0
  %366 = vmatpush1.msra.mxu0 0.0
  %367 = vmatprep.subr.mxu0 0.0
  %v368 = vand.u32 %v25, 4294901760
  %v369 = vsub.f32 %v25, %v368
  %v370 = vand.u32 %v369, 4294901760
  %371 = vmatpush1.msra.mxu0 %v370
  %372 = vmatprep.subr.mxu0 0.0
  %v373 = vand.u32 %v24, 4294901760
  %v374 = vsub.f32 %v24, %v373
  %v375 = vand.u32 %v374, 4294901760
  %376 = vmatpush1.msra.mxu0 %v375
  %377 = vmatprep.subr.mxu0 0.0
  %378 = vmatpush2.msra.mxu0 0.0
  %379 = vmatprep.subr.mxu0 0.0
  %380 = vmatpush2.msra.mxu0 0.0
  %381 = vmatprep.subr.mxu0 0.0
  %382 = vmatpush2.msra.mxu0 0.0
  %383 = vmatprep.subr.mxu0 0.0
  %384 = vmatpush2.msra.mxu0 0.0
  %385 = vmatprep.subr.mxu0 0.0
  %386 = vmatpush2.msra.mxu0 0.0
  %387 = vmatprep.subr.mxu0 0.0
  %388 = vmatpush2.msra.mxu0 0.0
  %389 = vmatprep.subr.mxu0 0.0
  %390 = vmatpush2.msra.mxu0 0.0
  %391 = vmatprep.subr.mxu0 0.0
  %392 = vmatpush2.msra.mxu0 0.0
  %393 = vmatprep.subr.mxu0 0.0
  %394 = vmatpush2.msra.mxu0 0.0
  %395 = vmatprep.subr.mxu0 0.0
  %396 = vmatpush2.msra.mxu0 0.0
  %397 = vmatprep.subr.mxu0 0.0
  %398 = vmatpush2.msra.mxu0 0.0
  %399 = vmatprep.subr.mxu0 0.0
  %400 = vmatpush2.msra.mxu0 0.0
  %401 = vmatprep.subr.mxu0 0.0
  %402 = vmatpush2.msra.mxu0 0.0
  %403 = vmatprep.subr.mxu0 0.0
  %404 = vmatpush2.msra.mxu0 0.0
  %405 = vmatprep.subr.mxu0 0.0
  %406 = vmatpush2.msra.mxu0 0.0
  %407 = vmatprep.subr.mxu0 0.0
  %408 = vmatpush2.msra.mxu0 0.0
  %409 = vmatprep.mubr.f32.mxu0 0.0
  %v410 = vand.u32 %v28, 4294901760
  %411 = vmatmul.mubr.f32.gmra.mxu0 %v410
  %v412 = vpop.f32.mrf.mxu0
  %v413 = vadd.f32 %v336, %v412
  %v414 = vpop.f32.mrf.mxu0
  %415 = vdwg.mxu0
  %416 = vmatprep.subr.mxu0 0.0
  %417 = vmatpush1.msra.mxu0 0.0
  %418 = vmatprep.subr.mxu0 0.0
  %419 = vmatpush1.msra.mxu0 0.0
  %420 = vmatprep.subr.mxu0 0.0
  %421 = vmatpush1.msra.mxu0 0.0
  %422 = vmatprep.subr.mxu0 0.0
  %423 = vmatpush1.msra.mxu0 0.0
  %424 = vmatprep.subr.mxu0 0.0
  %425 = vmatpush1.msra.mxu0 0.0
  %426 = vmatprep.subr.mxu0 0.0
  %427 = vmatpush1.msra.mxu0 0.0
  %428 = vmatprep.subr.mxu0 0.0
  %429 = vmatpush1.msra.mxu0 0.0
  %430 = vmatprep.subr.mxu0 0.0
  %431 = vmatpush1.msra.mxu0 0.0
  %432 = vmatprep.subr.mxu0 0.0
  %433 = vmatpush1.msra.mxu0 0.0
  %434 = vmatprep.subr.mxu0 0.0
  %435 = vmatpush1.msra.mxu0 0.0
  %436 = vmatprep.subr.mxu0 0.0
  %437 = vmatpush1.msra.mxu0 0.0
  %438 = vmatprep.subr.mxu0 0.0
  %439 = vmatpush1.msra.mxu0 0.0
  %440 = vmatprep.subr.mxu0 0.0
  %441 = vmatpush1.msra.mxu0 0.0
  %442 = vmatprep.subr.mxu0 0.0
  %443 = vmatpush1.msra.mxu0 0.0
  %444 = vmatprep.subr.mxu0 0.0
  %v445 = vand.u32 %v25, 4294901760
  %446 = vmatpush1.msra.mxu0 %v445
  %447 = vmatprep.subr.mxu0 0.0
  %v448 = vand.u32 %v24, 4294901760
  %449 = vmatpush1.msra.mxu0 %v448
  %450 = vmatprep.subr.mxu0 0.0
  %451 = vmatpush2.msra.mxu0 0.0
  %452 = vmatprep.subr.mxu0 0.0
  %453 = vmatpush2.msra.mxu0 0.0
  %454 = vmatprep.subr.mxu0 0.0
  %455 = vmatpush2.msra.mxu0 0.0
  %456 = vmatprep.subr.mxu0 0.0
  %457 = vmatpush2.msra.mxu0 0.0
  %458 = vmatprep.subr.mxu0 0.0
  %459 = vmatpush2.msra.mxu0 0.0
  %460 = vmatprep.subr.mxu0 0.0
  %461 = vmatpush2.msra.mxu0 0.0
  %462 = vmatprep.subr.mxu0 0.0
  %463 = vmatpush2.msra.mxu0 0.0
  %464 = vmatprep.subr.mxu0 0.0
  %465 = vmatpush2.msra.mxu0 0.0
  %466 = vmatprep.subr.mxu0 0.0
  %467 = vmatpush2.msra.mxu0 0.0
  %468 = vmatprep.subr.mxu0 0.0
  %469 = vmatpush2.msra.mxu0 0.0
  %470 = vmatprep.subr.mxu0 0.0
  %471 = vmatpush2.msra.mxu0 0.0
  %472 = vmatprep.subr.mxu0 0.0
  %473 = vmatpush2.msra.mxu0 0.0
  %474 = vmatprep.subr.mxu0 0.0
  %475 = vmatpush2.msra.mxu0 0.0
  %476 = vmatprep.subr.mxu0 0.0
  %477 = vmatpush2.msra.mxu0 0.0
  %478 = vmatprep.subr.mxu0 0.0
  %479 = vmatpush2.msra.mxu0 0.0
  %480 = vmatprep.subr.mxu0 0.0
  %481 = vmatpush2.msra.mxu0 0.0
  %482 = vmatprep.mubr.f32.mxu0 0.0
  %v483 = vand.u32 %v28, 4294901760
  %484 = vmatmul.mubr.f32.gmra.mxu0 %v483
  %v485 = vpop.f32.mrf.mxu0
  %v486 = vadd.f32 %v413, %v485
  %v487 = vpop.f32.mrf.mxu0
  %488 = vdwg.mxu0
  %v489 = vmul.f32 %v486, 0.25
  %v490 = vstv %s15
  %v491 = vrcp.pop %v490
  %s492 = vtos %v491
  %v493 = vlog2.pop %v489
  %v494 = vmul.f32 %v493, 0.6931472
  %v495 = vstv %s492
  %v496 = vmul.f32 %v494, %v495
  %v497 = vmul.f32 %v496, 1.442695
  %v498 = vpow.pop %v497
  %vm499 = vcmask 31744
  %500 = vst.msk [vmem:[%s3] sm:$0xff] %vm499, %v498
  // Predicated region
  $region14: #{tpu_custom_call.1} parent=0 // pred_check
    _
  $region15: #{tpu_custom_call.1} parent=0 // pred_check_branch
    %502 = sbr.rel (0) target = $region17
  $region16: #{tpu_custom_call.1} parent=0 // pred_region
    _
  $region17: #{tpu_custom_call.1} parent=0 // pred_fallthru
    _
  // Predicated region
  $region18: #{tpu_custom_call.1} parent=0 // pred_check
    _
  $region19: #{tpu_custom_call.1} parent=0 // pred_check_branch
    %504 = sbr.rel (0) target = $region21
  $region20: #{tpu_custom_call.1} parent=0 // pred_region
    _
  $region21: #{tpu_custom_call.1} parent=0 // pred_fallthru
    _

</llo_original>
